<compile_context>
chip_gen: v7x
topology: tpu7x:2x2x1
jax: 0.10.0
libtpu: 0.0.40
codegen_flags: <defaults>
</compile_context>

<pallas_src>
import functools

import jax
import jax.numpy as jnp
import numpy as np
from jax.experimental import pallas as pl
from jax.experimental.pallas import tpu as pltpu

EPS = 1e-6


def _residual_kernel(seed_ref, x_ref, alpha_ref, lnb_ref, wt_ref, b_ref, o_ref,
                     *, dropout_p, tm, feat):
    """One (TM, F) row tile: LN-variant -> Linear (bf16 MXU) -> dropout -> residual."""
    x = x_ref[...].astype(jnp.float32)                          # (TM, F)

    # --- "LayerNormalization" (min-centered, torch unbiased std, affine) ---
    # Single-pass stats: min / sum / sum-of-squares reductions, no second pass
    # over (x - mu); the divide becomes a reciprocal multiply (EUP slot on TPU).
    mn = jnp.min(x, axis=-1, keepdims=True)                     # x.min(dim=-1) quirk
    s = jnp.sum(x, axis=-1, keepdims=True)
    ss = jnp.sum(x * x, axis=-1, keepdims=True)
    var = jnp.maximum((ss - s * s * (1.0 / feat)) * (1.0 / (feat - 1)), 0.0)
    inv = 1.0 / (jnp.sqrt(var) + EPS)
    normed = alpha_ref[...] * ((x - mn) * inv) + lnb_ref[...]

    # --- sub_layer: Linear(F, F) on the MXU; bf16 operands, f32 accumulation ---
    y = jnp.dot(normed.astype(jnp.bfloat16), wt_ref[...],
                preferred_element_type=jnp.float32) + b_ref[...]

    # --- dropout (inverted) via counter-hash bits + pure-integer threshold ---
    if dropout_p > 0.0:
        thresh = jnp.uint32(min(int(round(dropout_p * 4294967296.0)), 0xFFFFFFFF))
        rows_i = jax.lax.broadcasted_iota(jnp.int32, y.shape, 0) + pl.program_id(0) * tm
        cols_i = jax.lax.broadcasted_iota(jnp.int32, y.shape, 1)
        ctr = (rows_i * feat + cols_i).astype(jnp.uint32)        # global element index
        z = ctr + seed_ref[0].astype(jnp.uint32) * jnp.uint32(0x9E3779B9)
        z = z ^ (z >> 16)
        z = z * jnp.uint32(0x7FEB352D)
        z = z ^ (z >> 15)
        z = z * jnp.uint32(0x846CA68B)
        z = z ^ (z >> 16)
        keep = z >= thresh                                       # P(keep) = 1 - p (±2^-32)
        y = jnp.where(keep, y * (1.0 / (1.0 - dropout_p)), 0.0)

    # --- residual add ---
    o_ref[...] = (x + y).astype(o_ref.dtype)


def _const_block_spec(block_shape, index_map):
    """Invariant operand: request a single buffer when the JAX version supports it."""
    try:
        return pl.BlockSpec(block_shape, index_map, pipeline_mode=pl.Buffered(1))
    except Exception:  # older JAX: fall back to default double-buffering
        return pl.BlockSpec(block_shape, index_map)


def _vmem_limit_bytes():
    """Per-chip VMEM budget with headroom (v7x has only 64 MiB per TensorCore)."""
    cap = 64 * 1024 * 1024  # conservative default (v7x)
    try:
        info_fn = getattr(pltpu, "get_tpu_info", None)
        if info_fn is not None:
            cap = int(info_fn().vmem_capacity_bytes)
    except Exception:
        pass
    return min(cap * 7 // 8, 120 * 1024 * 1024)


def _choose_tm(rows, feat, requested_tm, vmem_limit):
    """Largest multiple-of-8 row tile that keeps double-buffered x/out + W^T in budget."""
    weight_bytes = 2 * feat * feat * 2          # bf16 W^T, worst case double-buffered
    small_bytes = 4 * 4 * feat * 4              # alpha / ln_bias / linear bias buffers
    budget = (vmem_limit * 3) // 4 - weight_bytes - small_bytes
    per_row = 2 * 2 * feat * 4                  # x + out tiles, f32, double-buffered
    tm_cap = max(8, budget // per_row)
    rows8 = ((rows + 7) // 8) * 8
    tm = max(8, (min(requested_tm, tm_cap, rows8) // 8) * 8)
    return tm


def residual_connection(x, alpha, ln_bias, w, b, *, dropout_p, seed, tm=512):
    """x: [B, S, F]. Returns x + dropout(linear(layernorm_variant(x)))."""
    B, S, F = x.shape
    assert F > 1, "unbiased std needs F > 1"
    rows = B * S

    vmem_limit = _vmem_limit_bytes()
    tm_eff = _choose_tm(rows, F, tm, vmem_limit)
    rows_pad = ((rows + tm_eff - 1) // tm_eff) * tm_eff

    xf = x.reshape(rows, F)
    if rows_pad != rows:
        xf = jnp.pad(xf, ((0, rows_pad - rows), (0, 0)))

    alpha2 = alpha.reshape(1, F).astype(jnp.float32)
    lnb2 = ln_bias.reshape(1, F).astype(jnp.float32)
    wt = jnp.transpose(w).astype(jnp.bfloat16)      # (F, F) bf16, pre-transposed: y = n @ W^T
    b2 = b.reshape(1, F).astype(jnp.float32)
    seed_arr = jnp.asarray([seed], dtype=jnp.int32)

    kernel = functools.partial(_residual_kernel, dropout_p=float(dropout_p),
                               tm=tm_eff, feat=F)

    # NOTE: for best store throughput F should be a multiple of 128 (lane-dense).
    out = pl.pallas_call(
        kernel,
        out_shape=jax.ShapeDtypeStruct((rows_pad, F), x.dtype),
        grid_spec=pltpu.PrefetchScalarGridSpec(
            num_scalar_prefetch=1,                              # seed lands in SMEM
            grid=(rows_pad // tm_eff,),
            in_specs=[
                pl.BlockSpec((tm_eff, F), lambda i, seed: (i, 0)),      # x tile
                _const_block_spec((1, F), lambda i, seed: (0, 0)),      # alpha
                _const_block_spec((1, F), lambda i, seed: (0, 0)),      # ln bias
                _const_block_spec((F, F), lambda i, seed: (0, 0)),      # W^T (bf16)
                _const_block_spec((1, F), lambda i, seed: (0, 0)),      # linear bias
            ],
            out_specs=pl.BlockSpec((tm_eff, F), lambda i, seed: (i, 0)),
        ),
        compiler_params=pltpu.CompilerParams(
            dimension_semantics=("parallel",),
            vmem_limit_bytes=int(vmem_limit)),
    )(seed_arr, xf, alpha2, lnb2, wt, b2)

    return out[:rows].reshape(B, S, F)


def _reference_no_dropout(x, alpha, ln_bias, w, b):
    """Pure-JAX reference (dropout disabled, same bf16 matmul precision as the kernel)."""
    f = x.shape[-1]
    mn = jnp.min(x, axis=-1, keepdims=True)
    mu = jnp.mean(x, axis=-1, keepdims=True)
    std = jnp.sqrt(jnp.sum((x - mu) ** 2, axis=-1, keepdims=True) / (f - 1))
    normed = alpha * (x - mn) / (std + EPS) + ln_bias
    y = jnp.dot(normed.astype(jnp.bfloat16), w.T.astype(jnp.bfloat16),
                preferred_element_type=jnp.float32) + b
    return x + y


if __name__ == "__main__":
    B, S, F = 2, 64, 128   # F multiple of 128 keeps stores lane-dense
    key = jax.random.PRNGKey(0)
    kx, kw, kb = jax.random.split(key, 3)

    x = jax.random.normal(kx, (B, S, F), dtype=jnp.float32)

    # LayerNormalization params (as in __init__): alpha = ones, bias = zeros.
    alpha = jnp.ones((F,), dtype=jnp.float32)
    ln_bias = jnp.zeros((F,), dtype=jnp.float32)

    # Deterministic sub_layer = Linear(F, F).
    w = jax.random.normal(kw, (F, F), dtype=jnp.float32) * 0.05
    b = jax.random.normal(kb, (F,), dtype=jnp.float32) * 0.05

    # Correctness check with dropout disabled (identity dropout == eval mode).
    out_eval = residual_connection(x, alpha, ln_bias, w, b, dropout_p=0.0, seed=0)
    jax.block_until_ready(out_eval)
    ref_eval = _reference_no_dropout(x, alpha, ln_bias, w, b)
    np.testing.assert_allclose(np.asarray(out_eval), np.asarray(ref_eval),
                               rtol=1e-3, atol=1e-3)

    # Training-mode run with dropout active (in-kernel counter-hash PRNG).
    out_train = residual_connection(x, alpha, ln_bias, w, b, dropout_p=0.1, seed=1234)
    jax.block_until_ready(out_train)

    print("KERNEL_OK")
</pallas_src>

<mosaic_0001>
module attributes {stable_mosaic.version = 11 : i64} {
  func.func @_residual_kernel(%arg0: i32, %arg1: memref<1xi32, #tpu.memory_space<smem>>, %arg2: memref<128x128xf32, #tpu.memory_space<vmem>>, %arg3: memref<1x128xf32, #tpu.memory_space<vmem>>, %arg4: memref<1x128xf32, #tpu.memory_space<vmem>>, %arg5: memref<128x128xbf16, #tpu.memory_space<vmem>>, %arg6: memref<1x128xf32, #tpu.memory_space<vmem>>, %arg7: memref<128x128xf32, #tpu.memory_space<vmem>>) attributes {dimension_semantics = [#tpu.dimension_semantics<parallel>], iteration_bounds = array<i64: 1>, scalar_prefetch = 1 : i64, scratch_operands = 0 : i64, tpu.core_type = #tpu.core_type<tc>, window_params = [{transform_indices = @transform_0, window_bounds = array<i64: 128, 128>}, {pipeline_mode = #tpu.pipeline_mode<synchronous>, transform_indices = @transform_1, window_bounds = array<i64: 1, 128>}, {pipeline_mode = #tpu.pipeline_mode<synchronous>, transform_indices = @transform_2, window_bounds = array<i64: 1, 128>}, {pipeline_mode = #tpu.pipeline_mode<synchronous>, transform_indices = @transform_3, window_bounds = array<i64: 128, 128>}, {pipeline_mode = #tpu.pipeline_mode<synchronous>, transform_indices = @transform_4, window_bounds = array<i64: 1, 128>}, {transform_indices = @transform_5, window_bounds = array<i64: 128, 128>}]} {
    %c0 = arith.constant 0 : index
    %c0_0 = arith.constant 0 : index
    %0 = vector.load %arg2[%c0, %c0_0] : memref<128x128xf32, #tpu.memory_space<vmem>>, vector<128x128xf32>
    %cst = arith.constant dense<0x7F800000> : vector<128xf32>
    %1 = vector.multi_reduction <minimumf>, %0, %cst [1] : vector<128x128xf32> to vector<128xf32>
    %2 = vector.shape_cast %1 : vector<128xf32> to vector<128x1xf32>
    %cst_1 = arith.constant dense<0.000000e+00> : vector<128xf32>
    %3 = vector.multi_reduction <add>, %0, %cst_1 [1] : vector<128x128xf32> to vector<128xf32>
    %4 = vector.shape_cast %3 : vector<128xf32> to vector<128x1xf32>
    %5 = arith.mulf %0, %0 : vector<128x128xf32>
    %cst_2 = arith.constant dense<0.000000e+00> : vector<128xf32>
    %6 = vector.multi_reduction <add>, %5, %cst_2 [1] : vector<128x128xf32> to vector<128xf32>
    %7 = vector.shape_cast %6 : vector<128xf32> to vector<128x1xf32>
    %8 = arith.mulf %4, %4 : vector<128x1xf32>
    %cst_3 = arith.constant 7.812500e-03 : f32
    %9 = vector.broadcast %cst_3 : f32 to vector<128x1xf32>
    %10 = arith.mulf %8, %9 : vector<128x1xf32>
    %11 = arith.subf %7, %10 : vector<128x1xf32>
    %cst_4 = arith.constant 0.00787401571 : f32
    %12 = vector.broadcast %cst_4 : f32 to vector<128x1xf32>
    %13 = arith.mulf %11, %12 : vector<128x1xf32>
    %cst_5 = arith.constant 0.000000e+00 : f32
    %14 = vector.broadcast %cst_5 : f32 to vector<128x1xf32>
    %15 = arith.maximumf %13, %14 : vector<128x1xf32>
    %16 = math.sqrt %15 : vector<128x1xf32>
    %cst_6 = arith.constant 9.99999997E-7 : f32
    %17 = vector.broadcast %cst_6 : f32 to vector<128x1xf32>
    %18 = arith.addf %16, %17 : vector<128x1xf32>
    %cst_7 = arith.constant 1.000000e+00 : f32
    %19 = vector.broadcast %cst_7 : f32 to vector<128x1xf32>
    %20 = arith.divf %19, %18 : vector<128x1xf32>
    %c0_8 = arith.constant 0 : index
    %c0_9 = arith.constant 0 : index
    %21 = vector.load %arg3[%c0_8, %c0_9] : memref<1x128xf32, #tpu.memory_space<vmem>>, vector<1x128xf32>
    %22 = vector.broadcast %2 : vector<128x1xf32> to vector<128x128xf32>
    %23 = arith.subf %0, %22 : vector<128x128xf32>
    %24 = vector.broadcast %20 : vector<128x1xf32> to vector<128x128xf32>
    %25 = arith.mulf %23, %24 : vector<128x128xf32>
    %26 = vector.broadcast %21 : vector<1x128xf32> to vector<128x128xf32>
    %27 = arith.mulf %26, %25 : vector<128x128xf32>
    %c0_10 = arith.constant 0 : index
    %c0_11 = arith.constant 0 : index
    %28 = vector.load %arg4[%c0_10, %c0_11] : memref<1x128xf32, #tpu.memory_space<vmem>>, vector<1x128xf32>
    %29 = vector.broadcast %28 : vector<1x128xf32> to vector<128x128xf32>
    %30 = arith.addf %27, %29 : vector<128x128xf32>
    %31 = arith.truncf %30 : vector<128x128xf32> to vector<128x128xbf16>
    %c0_12 = arith.constant 0 : index
    %c0_13 = arith.constant 0 : index
    %32 = vector.load %arg5[%c0_12, %c0_13] : memref<128x128xbf16, #tpu.memory_space<vmem>>, vector<128x128xbf16>
    %cst_14 = arith.constant dense<0.000000e+00> : vector<128x128xf32>
    %33 = tpu.matmul %31, %32, %cst_14 {dimension_numbers = #tpu.dot_dimension_numbers<[1], [0], [0], [1], [0, 0, 1, 1], [], []>} : vector<128x128xbf16>, vector<128x128xbf16>, vector<128x128xf32> -> vector<128x128xf32>
    %c0_15 = arith.constant 0 : index
    %c0_16 = arith.constant 0 : index
    %34 = vector.load %arg6[%c0_15, %c0_16] : memref<1x128xf32, #tpu.memory_space<vmem>>, vector<1x128xf32>
    %35 = vector.broadcast %34 : vector<1x128xf32> to vector<128x128xf32>
    %36 = arith.addf %33, %35 : vector<128x128xf32>
    %37 = arith.addf %0, %36 : vector<128x128xf32>
    %c0_17 = arith.constant 0 : index
    %c0_18 = arith.constant 0 : index
    %38 = vector.load %arg7[%c0_17, %c0_18] : memref<128x128xf32, #tpu.memory_space<vmem>>, vector<128x128xf32>
    tpu.vector_store %arg7[%c0_17, %c0_18], %37 {strides = array<i32>} : memref<128x128xf32, #tpu.memory_space<vmem>>, vector<128x128xf32>,
    return
  }
  func.func @transform_0(%arg0: i32, %arg1: memref<1xi32, #tpu.memory_space<smem>>) -> (i32, i32) {
    %c0_i32 = arith.constant 0 : i32
    %c0_i32_0 = arith.constant 0 : i32
    return %arg0, %c0_i32 : i32, i32
  }
  func.func @transform_1(%arg0: i32, %arg1: memref<1xi32, #tpu.memory_space<smem>>) -> (i32, i32) {
    %c0_i32 = arith.constant 0 : i32
    %c0_i32_0 = arith.constant 0 : i32
    %c0_i32_1 = arith.constant 0 : i32
    return %c0_i32, %c0_i32_0 : i32, i32
  }
  func.func @transform_2(%arg0: i32, %arg1: memref<1xi32, #tpu.memory_space<smem>>) -> (i32, i32) {
    %c0_i32 = arith.constant 0 : i32
    %c0_i32_0 = arith.constant 0 : i32
    %c0_i32_1 = arith.constant 0 : i32
    return %c0_i32, %c0_i32_0 : i32, i32
  }
  func.func @transform_3(%arg0: i32, %arg1: memref<1xi32, #tpu.memory_space<smem>>) -> (i32, i32) {
    %c0_i32 = arith.constant 0 : i32
    %c0_i32_0 = arith.constant 0 : i32
    %c0_i32_1 = arith.constant 0 : i32
    return %c0_i32, %c0_i32_0 : i32, i32
  }
  func.func @transform_4(%arg0: i32, %arg1: memref<1xi32, #tpu.memory_space<smem>>) -> (i32, i32) {
    %c0_i32 = arith.constant 0 : i32
    %c0_i32_0 = arith.constant 0 : i32
    %c0_i32_1 = arith.constant 0 : i32
    return %c0_i32, %c0_i32_0 : i32, i32
  }
  func.func @transform_5(%arg0: i32, %arg1: memref<1xi32, #tpu.memory_space<smem>>) -> (i32, i32) {
    %c0_i32 = arith.constant 0 : i32
    %c0_i32_0 = arith.constant 0 : i32
    return %arg0, %c0_i32 : i32, i32
  }
}

</mosaic_0001>

<llo_original>
// kernel: tpu_custom_call.1
$region0: #{tpu_custom_call.1}
  #allocation0 [shape = 'u32[]', space=smem, size = 0x4, offset = 0x4, fixed_abs, tag = 'smem constant byte address 0x4 - core index']
  #allocation1 [shape = 'u32[144,128]{1,0:T(1,128)}', space=vmem, size = 0x12000, scoped, tag = 'internal scratch']
  #allocation2 [shape = 's32[1]{0}', space=sflag, size = 0x4, scoped, tag = 'scoped memory for tpu_custom_call.1']
  #allocation3 [shape = 's32[1]{0:T(128)S(6)}', space=smem, size = 0x200, scoped, tag = 'prefetched SMEM operand 0']
  %s0 = inlined_call_operand.<no memory space> [shape: s32[1], index: 0, kind: input, shape index: {}]
  %s1 = inlined_call_operand.hbm [shape: f32[128,128], index: 1, kind: input, shape index: {}]
  %s2 = inlined_call_operand.vmem [shape: f32[1,128], index: 2, kind: input, shape index: {}]
  %s3 = inlined_call_operand.vmem [shape: f32[1,128], index: 3, kind: input, shape index: {}]
  %s4 = inlined_call_operand.hbm [shape: bf16[128,128], index: 4, kind: input, shape index: {}]
  %s5 = inlined_call_operand.vmem [shape: f32[1,128], index: 5, kind: input, shape index: {}]
  %s6 = inlined_call_operand.hbm [shape: f32[128,128], index: 6, kind: output, shape index: {}]
  %s7 = sld [smem:[#allocation0]]
  $region38: #{tpu_custom_call.1} parent=0
    _
  %s9 = ssub.s32 1, %s7
  %s10 = scalar_select 0, %s9, %s7
  %11 = sst [smem:[#allocation3]] %s0
  $region1: #{tpu_custom_call.1} parent=0
    #allocation4 [shape = 'u8[65536]{0}', space=vmem, size = 0x10000, scoped, tag = 'input window, operand 1, single buffered']
    #allocation5 [shape = 's32[1]{0}', space=sflag, size = 0x4, scoped, tag = 'scoped memory for tpu_custom_call.1']
    #allocation6 [shape = 's32[1]{0}', space=sflag, size = 0x4, scoped, tag = 'scoped memory for tpu_custom_call.1']
    #allocation7 [shape = 'u8[32768]{0}', space=vmem, size = 0x8000, scoped, tag = 'input window, operand 4, single buffered']
    #allocation8 [shape = 's32[1]{0}', space=sflag, size = 0x4, scoped, tag = 'scoped memory for tpu_custom_call.1']
    #allocation9 [shape = 'u8[65536]{0}', space=vmem, size = 0x10000, scoped, tag = 'output window, operand 0, single buffered']
    %12 = vsyncpa [#allocation5], 0
    %13 = vsyncpa [#allocation8], 0
    %14 = vsyncpa [#allocation6], 0
    // Predicated region
    $region2: #{tpu_custom_call.1} parent=1 // pred_check
      _
    $region3: #{tpu_custom_call.1} parent=1 // pred_check_branch
      %16 = sbr.rel (0) target = $region5
    $region4: #{tpu_custom_call.1} parent=1 // pred_region
      %s18 = ssub.s32 2048, 2048
      %19 = vsyncadd [#allocation5], %s18
      %s20 = sshll.u32 [#allocation4], 4
      %s21 = int_to_ptr.vmem [resolvable:$true] %s20
      %26 = dma.hbm_to_vmem [thread:$0]  %s1, 2048, %s21, [#allocation5], 128, 128, 8
    $region5: #{tpu_custom_call.1} parent=1 // pred_fallthru
      _
    // Predicated region
    $region6: #{tpu_custom_call.1} parent=1 // pred_check
      _
    $region7: #{tpu_custom_call.1} parent=1 // pred_check_branch
      %28 = sbr.rel (0) target = $region9
    $region8: #{tpu_custom_call.1} parent=1 // pred_region
      _
    $region9: #{tpu_custom_call.1} parent=1 // pred_fallthru
      _
    // Predicated region
    $region10: #{tpu_custom_call.1} parent=1 // pred_check
      _
    $region11: #{tpu_custom_call.1} parent=1 // pred_check_branch
      %30 = sbr.rel (0) target = $region13
    $region12: #{tpu_custom_call.1} parent=1 // pred_region
      _
    $region13: #{tpu_custom_call.1} parent=1 // pred_fallthru
      _
    // Predicated region
    $region14: #{tpu_custom_call.1} parent=1 // pred_check
      _
    $region15: #{tpu_custom_call.1} parent=1 // pred_check_branch
      %32 = sbr.rel (0) target = $region17
    $region16: #{tpu_custom_call.1} parent=1 // pred_region
      %s34 = ssub.s32 1024, 1024
      %35 = vsyncadd [#allocation8], %s34
      %s36 = sshll.u32 [#allocation7], 4
      %s37 = int_to_ptr.vmem [resolvable:$true] %s36
      %42 = dma.hbm_to_vmem [thread:$0]  %s4, 1024, %s37, [#allocation8], 64, 64, 4
    $region17: #{tpu_custom_call.1} parent=1 // pred_fallthru
      _
    // Predicated region
    $region18: #{tpu_custom_call.1} parent=1 // pred_check
      _
    $region19: #{tpu_custom_call.1} parent=1 // pred_check_branch
      %44 = sbr.rel (0) target = $region21
    $region20: #{tpu_custom_call.1} parent=1 // pred_region
      _
    $region21: #{tpu_custom_call.1} parent=1 // pred_fallthru
      _
    // Predicated region
    $region22: #{tpu_custom_call.1} parent=1 // pred_check
      _
    $region23: #{tpu_custom_call.1} parent=1 // pred_check_branch
      %46 = sbr.rel (0) target = $region25
    $region24: #{tpu_custom_call.1} parent=1 // pred_region
      %47 = dma.done [#allocation5], 2048
    $region25: #{tpu_custom_call.1} parent=1 // pred_fallthru
      _
    // Predicated region
    $region26: #{tpu_custom_call.1} parent=1 // pred_check
      _
    $region27: #{tpu_custom_call.1} parent=1 // pred_check_branch
      %49 = sbr.rel (0) target = $region29
    $region28: #{tpu_custom_call.1} parent=1 // pred_region
      %50 = dma.done [#allocation8], 1024
    $region29: #{tpu_custom_call.1} parent=1 // pred_fallthru
      _
    %v52 = vld [vmem:[#allocation4] sm:$0xff]
    %v53 = vld [vmem:[#allocation4 + $0x8] sm:$0xff]
    %v54 = vld [vmem:[#allocation4 + $0x10] sm:$0xff]
    %v55 = vld [vmem:[#allocation4 + $0x18] sm:$0xff]
    %v56 = vld [vmem:[#allocation4 + $0x20] sm:$0xff]
    %v57 = vld [vmem:[#allocation4 + $0x28] sm:$0xff]
    %v58 = vld [vmem:[#allocation4 + $0x30] sm:$0xff]
    %v59 = vld [vmem:[#allocation4 + $0x38] sm:$0xff]
    %v60 = vld [vmem:[#allocation4 + $0x40] sm:$0xff]
    %v61 = vld [vmem:[#allocation4 + $0x48] sm:$0xff]
    %v62 = vld [vmem:[#allocation4 + $0x50] sm:$0xff]
    %v63 = vld [vmem:[#allocation4 + $0x58] sm:$0xff]
    %v64 = vld [vmem:[#allocation4 + $0x60] sm:$0xff]
    %v65 = vld [vmem:[#allocation4 + $0x68] sm:$0xff]
    %v66 = vld [vmem:[#allocation4 + $0x70] sm:$0xff]
    %v67 = vld [vmem:[#allocation4 + $0x78] sm:$0xff]
    %68 = vmin.xlane.f32.xlu0 %v52
    %v69 = vpop.xlane.xlu0 %68
    %70 = vmin.xlane.f32.xlu0 %v53
    %v71 = vpop.xlane.xlu0 %70
    %72 = vmin.xlane.f32.xlu0 %v54
    %v73 = vpop.xlane.xlu0 %72
    %74 = vmin.xlane.f32.xlu0 %v55
    %v75 = vpop.xlane.xlu0 %74
    %76 = vmin.xlane.f32.xlu0 %v56
    %v77 = vpop.xlane.xlu0 %76
    %78 = vmin.xlane.f32.xlu0 %v57
    %v79 = vpop.xlane.xlu0 %78
    %80 = vmin.xlane.f32.xlu0 %v58
    %v81 = vpop.xlane.xlu0 %80
    %82 = vmin.xlane.f32.xlu0 %v59
    %v83 = vpop.xlane.xlu0 %82
    %84 = vmin.xlane.f32.xlu0 %v60
    %v85 = vpop.xlane.xlu0 %84
    %86 = vmin.xlane.f32.xlu0 %v61
    %v87 = vpop.xlane.xlu0 %86
    %88 = vmin.xlane.f32.xlu0 %v62
    %v89 = vpop.xlane.xlu0 %88
    %90 = vmin.xlane.f32.xlu0 %v63
    %v91 = vpop.xlane.xlu0 %90
    %92 = vmin.xlane.f32.xlu0 %v64
    %v93 = vpop.xlane.xlu0 %92
    %94 = vmin.xlane.f32.xlu0 %v65
    %v95 = vpop.xlane.xlu0 %94
    %96 = vmin.xlane.f32.xlu0 %v66
    %v97 = vpop.xlane.xlu0 %96
    %98 = vmin.xlane.f32.xlu0 %v67
    %v99 = vpop.xlane.xlu0 %98
    %100 = vadd.xlane.f32.xlu0 %v52
    %v101 = vpop.xlane.xlu0 %100
    %102 = vadd.xlane.f32.xlu0 %v53
    %v103 = vpop.xlane.xlu0 %102
    %104 = vadd.xlane.f32.xlu0 %v54
    %v105 = vpop.xlane.xlu0 %104
    %106 = vadd.xlane.f32.xlu0 %v55
    %v107 = vpop.xlane.xlu0 %106
    %108 = vadd.xlane.f32.xlu0 %v56
    %v109 = vpop.xlane.xlu0 %108
    %110 = vadd.xlane.f32.xlu0 %v57
    %v111 = vpop.xlane.xlu0 %110
    %112 = vadd.xlane.f32.xlu0 %v58
    %v113 = vpop.xlane.xlu0 %112
    %114 = vadd.xlane.f32.xlu0 %v59
    %v115 = vpop.xlane.xlu0 %114
    %116 = vadd.xlane.f32.xlu0 %v60
    %v117 = vpop.xlane.xlu0 %116
    %118 = vadd.xlane.f32.xlu0 %v61
    %v119 = vpop.xlane.xlu0 %118
    %120 = vadd.xlane.f32.xlu0 %v62
    %v121 = vpop.xlane.xlu0 %120
    %122 = vadd.xlane.f32.xlu0 %v63
    %v123 = vpop.xlane.xlu0 %122
    %124 = vadd.xlane.f32.xlu0 %v64
    %v125 = vpop.xlane.xlu0 %124
    %126 = vadd.xlane.f32.xlu0 %v65
    %v127 = vpop.xlane.xlu0 %126
    %128 = vadd.xlane.f32.xlu0 %v66
    %v129 = vpop.xlane.xlu0 %128
    %130 = vadd.xlane.f32.xlu0 %v67
    %v131 = vpop.xlane.xlu0 %130
    %v132 = vmul.f32 %v52, %v52
    %v133 = vmul.f32 %v53, %v53
    %v134 = vmul.f32 %v54, %v54
    %v135 = vmul.f32 %v55, %v55
    %v136 = vmul.f32 %v56, %v56
    %v137 = vmul.f32 %v57, %v57
    %v138 = vmul.f32 %v58, %v58
    %v139 = vmul.f32 %v59, %v59
    %v140 = vmul.f32 %v60, %v60
    %v141 = vmul.f32 %v61, %v61
    %v142 = vmul.f32 %v62, %v62
    %v143 = vmul.f32 %v63, %v63
    %v144 = vmul.f32 %v64, %v64
    %v145 = vmul.f32 %v65, %v65
    %v146 = vmul.f32 %v66, %v66
    %v147 = vmul.f32 %v67, %v67
    %148 = vadd.xlane.f32.xlu0 %v132
    %v149 = vpop.xlane.xlu0 %148
    %150 = vadd.xlane.f32.xlu0 %v133
    %v151 = vpop.xlane.xlu0 %150
    %152 = vadd.xlane.f32.xlu0 %v134
    %v153 = vpop.xlane.xlu0 %152
    %154 = vadd.xlane.f32.xlu0 %v135
    %v155 = vpop.xlane.xlu0 %154
    %156 = vadd.xlane.f32.xlu0 %v136
    %v157 = vpop.xlane.xlu0 %156
    %158 = vadd.xlane.f32.xlu0 %v137
    %v159 = vpop.xlane.xlu0 %158
    %160 = vadd.xlane.f32.xlu0 %v138
    %v161 = vpop.xlane.xlu0 %160
    %162 = vadd.xlane.f32.xlu0 %v139
    %v163 = vpop.xlane.xlu0 %162
    %164 = vadd.xlane.f32.xlu0 %v140
    %v165 = vpop.xlane.xlu0 %164
    %166 = vadd.xlane.f32.xlu0 %v141
    %v167 = vpop.xlane.xlu0 %166
    %168 = vadd.xlane.f32.xlu0 %v142
    %v169 = vpop.xlane.xlu0 %168
    %170 = vadd.xlane.f32.xlu0 %v143
    %v171 = vpop.xlane.xlu0 %170
    %172 = vadd.xlane.f32.xlu0 %v144
    %v173 = vpop.xlane.xlu0 %172
    %174 = vadd.xlane.f32.xlu0 %v145
    %v175 = vpop.xlane.xlu0 %174
    %176 = vadd.xlane.f32.xlu0 %v146
    %v177 = vpop.xlane.xlu0 %176
    %178 = vadd.xlane.f32.xlu0 %v147
    %v179 = vpop.xlane.xlu0 %178
    %v180 = vmul.f32 %v101, %v101
    %v181 = vmul.f32 %v103, %v103
    %v182 = vmul.f32 %v105, %v105
    %v183 = vmul.f32 %v107, %v107
    %v184 = vmul.f32 %v109, %v109
    %v185 = vmul.f32 %v111, %v111
    %v186 = vmul.f32 %v113, %v113
    %v187 = vmul.f32 %v115, %v115
    %v188 = vmul.f32 %v117, %v117
    %v189 = vmul.f32 %v119, %v119
    %v190 = vmul.f32 %v121, %v121
    %v191 = vmul.f32 %v123, %v123
    %v192 = vmul.f32 %v125, %v125
    %v193 = vmul.f32 %v127, %v127
    %v194 = vmul.f32 %v129, %v129
    %v195 = vmul.f32 %v131, %v131
    %v196 = vmul.f32 %v180, 0.0078125
    %v197 = vmul.f32 %v181, 0.0078125
    %v198 = vmul.f32 %v182, 0.0078125
    %v199 = vmul.f32 %v183, 0.0078125
    %v200 = vmul.f32 %v184, 0.0078125
    %v201 = vmul.f32 %v185, 0.0078125
    %v202 = vmul.f32 %v186, 0.0078125
    %v203 = vmul.f32 %v187, 0.0078125
    %v204 = vmul.f32 %v188, 0.0078125
    %v205 = vmul.f32 %v189, 0.0078125
    %v206 = vmul.f32 %v190, 0.0078125
    %v207 = vmul.f32 %v191, 0.0078125
    %v208 = vmul.f32 %v192, 0.0078125
    %v209 = vmul.f32 %v193, 0.0078125
    %v210 = vmul.f32 %v194, 0.0078125
    %v211 = vmul.f32 %v195, 0.0078125
    %v212 = vsub.f32 %v149, %v196
    %v213 = vsub.f32 %v151, %v197
    %v214 = vsub.f32 %v153, %v198
    %v215 = vsub.f32 %v155, %v199
    %v216 = vsub.f32 %v157, %v200
    %v217 = vsub.f32 %v159, %v201
    %v218 = vsub.f32 %v161, %v202
    %v219 = vsub.f32 %v163, %v203
    %v220 = vsub.f32 %v165, %v204
    %v221 = vsub.f32 %v167, %v205
    %v222 = vsub.f32 %v169, %v206
    %v223 = vsub.f32 %v171, %v207
    %v224 = vsub.f32 %v173, %v208
    %v225 = vsub.f32 %v175, %v209
    %v226 = vsub.f32 %v177, %v210
    %v227 = vsub.f32 %v179, %v211
    %v228 = vmul.f32 %v212, 0.007874016
    %v229 = vmul.f32 %v213, 0.007874016
    %v230 = vmul.f32 %v214, 0.007874016
    %v231 = vmul.f32 %v215, 0.007874016
    %v232 = vmul.f32 %v216, 0.007874016
    %v233 = vmul.f32 %v217, 0.007874016
    %v234 = vmul.f32 %v218, 0.007874016
    %v235 = vmul.f32 %v219, 0.007874016
    %v236 = vmul.f32 %v220, 0.007874016
    %v237 = vmul.f32 %v221, 0.007874016
    %v238 = vmul.f32 %v222, 0.007874016
    %v239 = vmul.f32 %v223, 0.007874016
    %v240 = vmul.f32 %v224, 0.007874016
    %v241 = vmul.f32 %v225, 0.007874016
    %v242 = vmul.f32 %v226, 0.007874016
    %v243 = vmul.f32 %v227, 0.007874016
    %v244 = vmax.f32 %v228, 0.0
    %v245 = vmax.f32 %v229, 0.0
    %v246 = vmax.f32 %v230, 0.0
    %v247 = vmax.f32 %v231, 0.0
    %v248 = vmax.f32 %v232, 0.0
    %v249 = vmax.f32 %v233, 0.0
    %v250 = vmax.f32 %v234, 0.0
    %v251 = vmax.f32 %v235, 0.0
    %v252 = vmax.f32 %v236, 0.0
    %v253 = vmax.f32 %v237, 0.0
    %v254 = vmax.f32 %v238, 0.0
    %v255 = vmax.f32 %v239, 0.0
    %v256 = vmax.f32 %v240, 0.0
    %v257 = vmax.f32 %v241, 0.0
    %v258 = vmax.f32 %v242, 0.0
    %v259 = vmax.f32 %v243, 0.0
    %v260 = vrsqrt.pop %v244
    %v261 = vmul.f32 %v244, %v260
    %vm262 = vcmp.eq.f32.partialorder %v244, inf
    %v263 = vsel %vm262, %v244, %v261
    %vm264 = vcmp.eq.f32.partialorder %v244, 0.0
    %v265 = vand.u32 %v244, 2147483648
    %v266 = vsel %vm264, %v265, %v263
    %v267 = vrsqrt.pop %v245
    %v268 = vmul.f32 %v245, %v267
    %vm269 = vcmp.eq.f32.partialorder %v245, inf
    %v270 = vsel %vm269, %v245, %v268
    %vm271 = vcmp.eq.f32.partialorder %v245, 0.0
    %v272 = vand.u32 %v245, 2147483648
    %v273 = vsel %vm271, %v272, %v270
    %v274 = vrsqrt.pop %v246
    %v275 = vmul.f32 %v246, %v274
    %vm276 = vcmp.eq.f32.partialorder %v246, inf
    %v277 = vsel %vm276, %v246, %v275
    %vm278 = vcmp.eq.f32.partialorder %v246, 0.0
    %v279 = vand.u32 %v246, 2147483648
    %v280 = vsel %vm278, %v279, %v277
    %v281 = vrsqrt.pop %v247
    %v282 = vmul.f32 %v247, %v281
    %vm283 = vcmp.eq.f32.partialorder %v247, inf
    %v284 = vsel %vm283, %v247, %v282
    %vm285 = vcmp.eq.f32.partialorder %v247, 0.0
    %v286 = vand.u32 %v247, 2147483648
    %v287 = vsel %vm285, %v286, %v284
    %v288 = vrsqrt.pop %v248
    %v289 = vmul.f32 %v248, %v288
    %vm290 = vcmp.eq.f32.partialorder %v248, inf
    %v291 = vsel %vm290, %v248, %v289
    %vm292 = vcmp.eq.f32.partialorder %v248, 0.0
    %v293 = vand.u32 %v248, 2147483648
    %v294 = vsel %vm292, %v293, %v291
    %v295 = vrsqrt.pop %v249
    %v296 = vmul.f32 %v249, %v295
    %vm297 = vcmp.eq.f32.partialorder %v249, inf
    %v298 = vsel %vm297, %v249, %v296
    %vm299 = vcmp.eq.f32.partialorder %v249, 0.0
    %v300 = vand.u32 %v249, 2147483648
    %v301 = vsel %vm299, %v300, %v298
    %v302 = vrsqrt.pop %v250
    %v303 = vmul.f32 %v250, %v302
    %vm304 = vcmp.eq.f32.partialorder %v250, inf
    %v305 = vsel %vm304, %v250, %v303
    %vm306 = vcmp.eq.f32.partialorder %v250, 0.0
    %v307 = vand.u32 %v250, 2147483648
    %v308 = vsel %vm306, %v307, %v305
    %v309 = vrsqrt.pop %v251
    %v310 = vmul.f32 %v251, %v309
    %vm311 = vcmp.eq.f32.partialorder %v251, inf
    %v312 = vsel %vm311, %v251, %v310
    %vm313 = vcmp.eq.f32.partialorder %v251, 0.0
    %v314 = vand.u32 %v251, 2147483648
    %v315 = vsel %vm313, %v314, %v312
    %v316 = vrsqrt.pop %v252
    %v317 = vmul.f32 %v252, %v316
    %vm318 = vcmp.eq.f32.partialorder %v252, inf
    %v319 = vsel %vm318, %v252, %v317
    %vm320 = vcmp.eq.f32.partialorder %v252, 0.0
    %v321 = vand.u32 %v252, 2147483648
    %v322 = vsel %vm320, %v321, %v319
    %v323 = vrsqrt.pop %v253
    %v324 = vmul.f32 %v253, %v323
    %vm325 = vcmp.eq.f32.partialorder %v253, inf
    %v326 = vsel %vm325, %v253, %v324
    %vm327 = vcmp.eq.f32.partialorder %v253, 0.0
    %v328 = vand.u32 %v253, 2147483648
    %v329 = vsel %vm327, %v328, %v326
    %v330 = vrsqrt.pop %v254
    %v331 = vmul.f32 %v254, %v330
    %vm332 = vcmp.eq.f32.partialorder %v254, inf
    %v333 = vsel %vm332, %v254, %v331
    %vm334 = vcmp.eq.f32.partialorder %v254, 0.0
    %v335 = vand.u32 %v254, 2147483648
    %v336 = vsel %vm334, %v335, %v333
    %v337 = vrsqrt.pop %v255
    %v338 = vmul.f32 %v255, %v337
    %vm339 = vcmp.eq.f32.partialorder %v255, inf
    %v340 = vsel %vm339, %v255, %v338
    %vm341 = vcmp.eq.f32.partialorder %v255, 0.0
    %v342 = vand.u32 %v255, 2147483648
    %v343 = vsel %vm341, %v342, %v340
    %v344 = vrsqrt.pop %v256
    %v345 = vmul.f32 %v256, %v344
    %vm346 = vcmp.eq.f32.partialorder %v256, inf
    %v347 = vsel %vm346, %v256, %v345
    %vm348 = vcmp.eq.f32.partialorder %v256, 0.0
    %v349 = vand.u32 %v256, 2147483648
    %v350 = vsel %vm348, %v349, %v347
    %v351 = vrsqrt.pop %v257
    %v352 = vmul.f32 %v257, %v351
    %vm353 = vcmp.eq.f32.partialorder %v257, inf
    %v354 = vsel %vm353, %v257, %v352
    %vm355 = vcmp.eq.f32.partialorder %v257, 0.0
    %v356 = vand.u32 %v257, 2147483648
    %v357 = vsel %vm355, %v356, %v354
    %v358 = vrsqrt.pop %v258
    %v359 = vmul.f32 %v258, %v358
    %vm360 = vcmp.eq.f32.partialorder %v258, inf
    %v361 = vsel %vm360, %v258, %v359
    %vm362 = vcmp.eq.f32.partialorder %v258, 0.0
    %v363 = vand.u32 %v258, 2147483648
    %v364 = vsel %vm362, %v363, %v361
    %v365 = vrsqrt.pop %v259
    %v366 = vmul.f32 %v259, %v365
    %vm367 = vcmp.eq.f32.partialorder %v259, inf
    %v368 = vsel %vm367, %v259, %v366
    %vm369 = vcmp.eq.f32.partialorder %v259, 0.0
    %v370 = vand.u32 %v259, 2147483648
    %v371 = vsel %vm369, %v370, %v368
    %v372 = vadd.f32 %v266, 1e-06
    %v373 = vadd.f32 %v273, 1e-06
    %v374 = vadd.f32 %v280, 1e-06
    %v375 = vadd.f32 %v287, 1e-06
    %v376 = vadd.f32 %v294, 1e-06
    %v377 = vadd.f32 %v301, 1e-06
    %v378 = vadd.f32 %v308, 1e-06
    %v379 = vadd.f32 %v315, 1e-06
    %v380 = vadd.f32 %v322, 1e-06
    %v381 = vadd.f32 %v329, 1e-06
    %v382 = vadd.f32 %v336, 1e-06
    %v383 = vadd.f32 %v343, 1e-06
    %v384 = vadd.f32 %v350, 1e-06
    %v385 = vadd.f32 %v357, 1e-06
    %v386 = vadd.f32 %v364, 1e-06
    %v387 = vadd.f32 %v371, 1e-06
    %v388 = vrcp.pop %v372
    %v389 = vmul.f32 1.0, %v388
    %v390 = vrcp.pop %v373
    %v391 = vmul.f32 1.0, %v390
    %v392 = vrcp.pop %v374
    %v393 = vmul.f32 1.0, %v392
    %v394 = vrcp.pop %v375
    %v395 = vmul.f32 1.0, %v394
    %v396 = vrcp.pop %v376
    %v397 = vmul.f32 1.0, %v396
    %v398 = vrcp.pop %v377
    %v399 = vmul.f32 1.0, %v398
    %v400 = vrcp.pop %v378
    %v401 = vmul.f32 1.0, %v400
    %v402 = vrcp.pop %v379
    %v403 = vmul.f32 1.0, %v402
    %v404 = vrcp.pop %v380
    %v405 = vmul.f32 1.0, %v404
    %v406 = vrcp.pop %v381
    %v407 = vmul.f32 1.0, %v406
    %v408 = vrcp.pop %v382
    %v409 = vmul.f32 1.0, %v408
    %v410 = vrcp.pop %v383
    %v411 = vmul.f32 1.0, %v410
    %v412 = vrcp.pop %v384
    %v413 = vmul.f32 1.0, %v412
    %v414 = vrcp.pop %v385
    %v415 = vmul.f32 1.0, %v414
    %v416 = vrcp.pop %v386
    %v417 = vmul.f32 1.0, %v416
    %v418 = vrcp.pop %v387
    %v419 = vmul.f32 1.0, %v418
    %v420 = vld [vmem:[%s2] sm:$0x1]
    %v421 = vsub.f32 %v52, %v69
    %v422 = vsub.f32 %v53, %v71
    %v423 = vsub.f32 %v54, %v73
    %v424 = vsub.f32 %v55, %v75
    %v425 = vsub.f32 %v56, %v77
    %v426 = vsub.f32 %v57, %v79
    %v427 = vsub.f32 %v58, %v81
    %v428 = vsub.f32 %v59, %v83
    %v429 = vsub.f32 %v60, %v85
    %v430 = vsub.f32 %v61, %v87
    %v431 = vsub.f32 %v62, %v89
    %v432 = vsub.f32 %v63, %v91
    %v433 = vsub.f32 %v64, %v93
    %v434 = vsub.f32 %v65, %v95
    %v435 = vsub.f32 %v66, %v97
    %v436 = vsub.f32 %v67, %v99
    %v437 = vmul.f32 %v421, %v389
    %v438 = vmul.f32 %v422, %v391
    %v439 = vmul.f32 %v423, %v393
    %v440 = vmul.f32 %v424, %v395
    %v441 = vmul.f32 %v425, %v397
    %v442 = vmul.f32 %v426, %v399
    %v443 = vmul.f32 %v427, %v401
    %v444 = vmul.f32 %v428, %v403
    %v445 = vmul.f32 %v429, %v405
    %v446 = vmul.f32 %v430, %v407
    %v447 = vmul.f32 %v431, %v409
    %v448 = vmul.f32 %v432, %v411
    %v449 = vmul.f32 %v433, %v413
    %v450 = vmul.f32 %v434, %v415
    %v451 = vmul.f32 %v435, %v417
    %v452 = vmul.f32 %v436, %v419
    %v454 = vlaneseq
    %v455 = vshrl.u32 %v454, 7
    %v456 = vsub.s32 0, %v455
    %v457 = vrot.slane %v420, %v456
    %v459 = vmul.f32 %v457, %v437
    %v460 = vmul.f32 %v457, %v438
    %v461 = vmul.f32 %v457, %v439
    %v462 = vmul.f32 %v457, %v440
    %v463 = vmul.f32 %v457, %v441
    %v464 = vmul.f32 %v457, %v442
    %v465 = vmul.f32 %v457, %v443
    %v466 = vmul.f32 %v457, %v444
    %v467 = vmul.f32 %v457, %v445
    %v468 = vmul.f32 %v457, %v446
    %v469 = vmul.f32 %v457, %v447
    %v470 = vmul.f32 %v457, %v448
    %v471 = vmul.f32 %v457, %v449
    %v472 = vmul.f32 %v457, %v450
    %v473 = vmul.f32 %v457, %v451
    %v474 = vmul.f32 %v457, %v452
    %v475 = vld [vmem:[%s3] sm:$0x1]
    %v477 = vlaneseq
    %v478 = vshrl.u32 %v477, 7
    %v479 = vsub.s32 0, %v478
    %v480 = vrot.slane %v475, %v479
    %v482 = vadd.f32 %v459, %v480
    %v483 = vadd.f32 %v460, %v480
    %v484 = vadd.f32 %v461, %v480
    %v485 = vadd.f32 %v462, %v480
    %v486 = vadd.f32 %v463, %v480
    %v487 = vadd.f32 %v464, %v480
    %v488 = vadd.f32 %v465, %v480
    %v489 = vadd.f32 %v466, %v480
    %v490 = vadd.f32 %v467, %v480
    %v491 = vadd.f32 %v468, %v480
    %v492 = vadd.f32 %v469, %v480
    %v493 = vadd.f32 %v470, %v480
    %v494 = vadd.f32 %v471, %v480
    %v495 = vadd.f32 %v472, %v480
    %v496 = vadd.f32 %v473, %v480
    %v497 = vadd.f32 %v474, %v480
    %v498 = vpack.c.bf16 %v483, %v482
    %v499 = vpack.c.bf16 %v485, %v484
    %v500 = vpack.c.bf16 %v487, %v486
    %v501 = vpack.c.bf16 %v489, %v488
    %v502 = vpack.c.bf16 %v491, %v490
    %v503 = vpack.c.bf16 %v493, %v492
    %v504 = vpack.c.bf16 %v495, %v494
    %v505 = vpack.c.bf16 %v497, %v496
    %v506 = vld [vmem:[#allocation7] sm:$0xf]
    %v507 = vld [vmem:[#allocation7 + $0x4] sm:$0xf]
    %v508 = vld [vmem:[#allocation7 + $0x8] sm:$0xf]
    %v509 = vld [vmem:[#allocation7 + $0xc] sm:$0xf]
    %v510 = vld [vmem:[#allocation7 + $0x10] sm:$0xf]
    %v511 = vld [vmem:[#allocation7 + $0x14] sm:$0xf]
    %v512 = vld [vmem:[#allocation7 + $0x18] sm:$0xf]
    %v513 = vld [vmem:[#allocation7 + $0x1c] sm:$0xf]
    %v514 = vld [vmem:[#allocation7 + $0x20] sm:$0xf]
    %v515 = vld [vmem:[#allocation7 + $0x24] sm:$0xf]
    %v516 = vld [vmem:[#allocation7 + $0x28] sm:$0xf]
    %v517 = vld [vmem:[#allocation7 + $0x2c] sm:$0xf]
    %v518 = vld [vmem:[#allocation7 + $0x30] sm:$0xf]
    %v519 = vld [vmem:[#allocation7 + $0x34] sm:$0xf]
    %v520 = vld [vmem:[#allocation7 + $0x38] sm:$0xf]
    %v521 = vld [vmem:[#allocation7 + $0x3c] sm:$0xf]
    %v522 = vld [vmem:[%s5] sm:$0x1]
    %v524 = vlaneseq
    %v525 = vshrl.u32 %v524, 7
    %v526 = vsub.s32 0, %v525
    %v527 = vrot.slane %v522, %v526
    %v545 = vunpack.c.l.b16 %v506
    %v546 = vunpack.c.l.b16 %v507
    %v547 = vunpack.c.l.b16 %v508
    %v548 = vunpack.c.l.b16 %v509
    %v549 = vunpack.c.l.b16 %v510
    %v550 = vunpack.c.l.b16 %v511
    %v551 = vunpack.c.l.b16 %v512
    %v552 = vunpack.c.l.b16 %v513
    %v553 = vunpack.c.l.b16 %v514
    %v554 = vunpack.c.l.b16 %v515
    %v555 = vunpack.c.l.b16 %v516
    %v556 = vunpack.c.l.b16 %v517
    %v557 = vunpack.c.l.b16 %v518
    %v558 = vunpack.c.l.b16 %v519
    %v559 = vunpack.c.l.b16 %v520
    %v560 = vunpack.c.l.b16 %v521
    %v561 = vpack.c.b16 %v546, %v545
    %v562 = vpack.c.b16 %v548, %v547
    %v563 = vpack.c.b16 %v550, %v549
    %v564 = vpack.c.b16 %v552, %v551
    %v565 = vpack.c.b16 %v554, %v553
    %v566 = vpack.c.b16 %v556, %v555
    %v567 = vpack.c.b16 %v558, %v557
    %v568 = vpack.c.b16 %v560, %v559
    %577 = vmatprep.subr.bf16.mxu0 0
    %578 = vmatpush1.bf16.msra.mxu0 %v561
    %579 = vmatprep.subr.bf16.mxu0 0
    %580 = vmatpush1.bf16.msra.mxu0 %v562
    %581 = vmatprep.subr.bf16.mxu0 0
    %582 = vmatpush1.bf16.msra.mxu0 %v563
    %583 = vmatprep.subr.bf16.mxu0 0
    %584 = vmatpush1.bf16.msra.mxu0 %v564
    %585 = vmatprep.subr.bf16.mxu0 0
    %586 = vmatpush1.bf16.msra.mxu0 %v565
    %587 = vmatprep.subr.bf16.mxu0 0
    %588 = vmatpush1.bf16.msra.mxu0 %v566
    %589 = vmatprep.subr.bf16.mxu0 0
    %590 = vmatpush1.bf16.msra.mxu0 %v567
    %591 = vmatprep.subr.bf16.mxu0 0
    %592 = vmatpush1.bf16.msra.mxu0 %v568
    %593 = vmatprep.subr.bf16.mxu0 0
    %594 = vmatpush1.bf16.msra.mxu0 0
    %595 = vmatprep.subr.bf16.mxu0 0
    %596 = vmatpush1.bf16.msra.mxu0 0
    %597 = vmatprep.subr.bf16.mxu0 0
    %598 = vmatpush1.bf16.msra.mxu0 0
    %599 = vmatprep.subr.bf16.mxu0 0
    %600 = vmatpush1.bf16.msra.mxu0 0
    %601 = vmatprep.subr.bf16.mxu0 0
    %602 = vmatpush1.bf16.msra.mxu0 0
    %603 = vmatprep.subr.bf16.mxu0 0
    %604 = vmatpush1.bf16.msra.mxu0 0
    %605 = vmatprep.subr.bf16.mxu0 0
    %606 = vmatpush1.bf16.msra.mxu0 0
    %607 = vmatprep.subr.bf16.mxu0 0
    %608 = vmatpush1.bf16.msra.mxu0 0
    %609 = vmatprep.mubr.bf16.mxu0 0
    %610 = vmatmul.mubr.bf16.gmra.mrb[0].mxu0 %v498
    %v611 = vpop.f32.mrb[0].mxu0
    %v612 = vadd.f32 %v527, %v611
    %v613 = vpop.f32.mrb[0].mxu0
    %v614 = vpop.f32.mrb[0].mxu0
    %v615 = vadd.f32 %v527, %v614
    %v616 = vpop.f32.mrb[0].mxu0
    %617 = vmatprep.mubr.bf16.mxu0 0
    %618 = vmatmul.mubr.bf16.gmra.mrb[0].mxu0 %v499
    %v619 = vpop.f32.mrb[0].mxu0
    %v620 = vadd.f32 %v527, %v619
    %v621 = vpop.f32.mrb[0].mxu0
    %v622 = vpop.f32.mrb[0].mxu0
    %v623 = vadd.f32 %v527, %v622
    %v624 = vpop.f32.mrb[0].mxu0
    %625 = vmatprep.mubr.bf16.mxu0 0
    %626 = vmatmul.mubr.bf16.gmra.mrb[0].mxu0 %v500
    %v627 = vpop.f32.mrb[0].mxu0
    %v628 = vadd.f32 %v527, %v627
    %v629 = vpop.f32.mrb[0].mxu0
    %v630 = vpop.f32.mrb[0].mxu0
    %v631 = vadd.f32 %v527, %v630
    %v632 = vpop.f32.mrb[0].mxu0
    %633 = vmatprep.mubr.bf16.mxu0 0
    %634 = vmatmul.mubr.bf16.gmra.mrb[0].mxu0 %v501
    %v635 = vpop.f32.mrb[0].mxu0
    %v636 = vadd.f32 %v527, %v635
    %v637 = vpop.f32.mrb[0].mxu0
    %v638 = vpop.f32.mrb[0].mxu0
    %v639 = vadd.f32 %v527, %v638
    %v640 = vpop.f32.mrb[0].mxu0
    %641 = vmatprep.mubr.bf16.mxu0 0
    %642 = vmatmul.mubr.bf16.gmra.mrb[0].mxu0 %v502
    %v643 = vpop.f32.mrb[0].mxu0
    %v644 = vadd.f32 %v527, %v643
    %v645 = vpop.f32.mrb[0].mxu0
    %v646 = vpop.f32.mrb[0].mxu0
    %v647 = vadd.f32 %v527, %v646
    %v648 = vpop.f32.mrb[0].mxu0
    %649 = vmatprep.mubr.bf16.mxu0 0
    %650 = vmatmul.mubr.bf16.gmra.mrb[0].mxu0 %v503
    %v651 = vpop.f32.mrb[0].mxu0
    %v652 = vadd.f32 %v527, %v651
    %v653 = vpop.f32.mrb[0].mxu0
    %v654 = vpop.f32.mrb[0].mxu0
    %v655 = vadd.f32 %v527, %v654
    %v656 = vpop.f32.mrb[0].mxu0
    %657 = vmatprep.mubr.bf16.mxu0 0
    %658 = vmatmul.mubr.bf16.gmra.mrb[0].mxu0 %v504
    %v659 = vpop.f32.mrb[0].mxu0
    %v660 = vadd.f32 %v527, %v659
    %v661 = vpop.f32.mrb[0].mxu0
    %v662 = vpop.f32.mrb[0].mxu0
    %v663 = vadd.f32 %v527, %v662
    %v664 = vpop.f32.mrb[0].mxu0
    %665 = vmatprep.mubr.bf16.mxu0 0
    %666 = vmatmul.mubr.bf16.gmra.mrb[0].mxu0 %v505
    %v667 = vpop.f32.mrb[0].mxu0
    %v668 = vadd.f32 %v527, %v667
    %v669 = vpop.f32.mrb[0].mxu0
    %v670 = vpop.f32.mrb[0].mxu0
    %v671 = vadd.f32 %v527, %v670
    %v672 = vpop.f32.mrb[0].mxu0
    %673 = vdwg.mxu0
    %v674 = vadd.f32 %v52, %v612
    %v675 = vadd.f32 %v53, %v615
    %v676 = vadd.f32 %v54, %v620
    %v677 = vadd.f32 %v55, %v623
    %v678 = vadd.f32 %v56, %v628
    %v679 = vadd.f32 %v57, %v631
    %v680 = vadd.f32 %v58, %v636
    %v681 = vadd.f32 %v59, %v639
    %v682 = vadd.f32 %v60, %v644
    %v683 = vadd.f32 %v61, %v647
    %v684 = vadd.f32 %v62, %v652
    %v685 = vadd.f32 %v63, %v655
    %v686 = vadd.f32 %v64, %v660
    %v687 = vadd.f32 %v65, %v663
    %v688 = vadd.f32 %v66, %v668
    %v689 = vadd.f32 %v67, %v671
    %690 = vst [vmem:[#allocation9] sm:$0xff] %v674
    %691 = vst [vmem:[#allocation9 + $0x8] sm:$0xff] %v675
    %692 = vst [vmem:[#allocation9 + $0x10] sm:$0xff] %v676
    %693 = vst [vmem:[#allocation9 + $0x18] sm:$0xff] %v677
    %694 = vst [vmem:[#allocation9 + $0x20] sm:$0xff] %v678
    %695 = vst [vmem:[#allocation9 + $0x28] sm:$0xff] %v679
    %696 = vst [vmem:[#allocation9 + $0x30] sm:$0xff] %v680
    %697 = vst [vmem:[#allocation9 + $0x38] sm:$0xff] %v681
    %698 = vst [vmem:[#allocation9 + $0x40] sm:$0xff] %v682
    %699 = vst [vmem:[#allocation9 + $0x48] sm:$0xff] %v683
    %700 = vst [vmem:[#allocation9 + $0x50] sm:$0xff] %v684
    %701 = vst [vmem:[#allocation9 + $0x58] sm:$0xff] %v685
    %702 = vst [vmem:[#allocation9 + $0x60] sm:$0xff] %v686
    %703 = vst [vmem:[#allocation9 + $0x68] sm:$0xff] %v687
    %704 = vst [vmem:[#allocation9 + $0x70] sm:$0xff] %v688
    %705 = vst [vmem:[#allocation9 + $0x78] sm:$0xff] %v689
    // Predicated region
    $region30: #{tpu_custom_call.1} parent=1 // pred_check
      _
    $region31: #{tpu_custom_call.1} parent=1 // pred_check_branch
      %707 = sbr.rel (0) target = $region33
    $region32: #{tpu_custom_call.1} parent=1 // pred_region
      %s709 = ssub.s32 2048, 2048
      %710 = vsyncadd [#allocation6], %s709
      %s711 = sshll.u32 [#allocation9], 4
      %s712 = int_to_ptr.vmem [resolvable:$true] %s711
      %717 = dma.vmem_to_hbm [thread:$0]  %s712, 2048, %s6, [#allocation6], 128, 128, 8
    $region33: #{tpu_custom_call.1} parent=1 // pred_fallthru
      _
    // Predicated region
    $region34: #{tpu_custom_call.1} parent=1 // pred_check
      _
    $region35: #{tpu_custom_call.1} parent=1 // pred_check_branch
      %719 = sbr.rel (0) target = $region37
    $region36: #{tpu_custom_call.1} parent=1 // pred_region
      %720 = dma.done [#allocation6], 2048
    $region37: #{tpu_custom_call.1} parent=1 // pred_fallthru
      _
    %721 = vsyncpa [#allocation5], 1
    %722 = vsyncpa [#allocation8], 1
    %723 = vsyncpa [#allocation6], 1

</llo_original>
